<compile_context>
chip_gen: v6e
topology: v6e:2x2x1
jax: 0.10.0
libtpu: 0.0.40
codegen_flags: <defaults>
</compile_context>

<pallas_src>
import jax
import jax.numpy as jnp
from jax.experimental import pallas as pl
from jax.experimental.pallas import tpu as pltpu

D_MODEL = 8
MAX_LEN = 10
BATCH = 2


def make_rope_tables(d_model: int, max_len: int):
    """Replicates RotaryPositionalEncoding.__init__, then (a) folds the rotate_half
    sign into the sin table and (b) transposes to channel-major (d_model, max_len)
    to match the kernel layout (seq on lanes)."""
    pos = jnp.arange(max_len, dtype=jnp.float32)[:, None]                       # (max_len, 1)
    p = 10000.0 ** (-jnp.arange(0, d_model // 2, dtype=jnp.float32) / d_model)[None, :]
    m8 = pos * p                                                                # (max_len, d/2)
    ang = jnp.concatenate([m8, m8], axis=1)                                     # repeat(1, 2)
    cos = jnp.cos(ang)                                                          # (max_len, d)
    sin = jnp.sin(ang)
    half = d_model // 2
    # rotate_half(x) = cat([-x_hi, x_lo]) = roll(x, half) * sign, sign = [-1]*half + [1]*half
    sign = jnp.concatenate(
        [-jnp.ones((half,), jnp.float32), jnp.ones((half,), jnp.float32)])
    sin_signed = sin * sign[None, :]
    return cos.T, sin_signed.T                                                  # each (d, max_len)


def rope_kernel(x_ref, cos_ref, sin_ref, o_ref):
    # x_ref / cos_ref / sin_ref / o_ref : (d_model, seq_tile)
    # channel axis -> sublanes (8 exactly), seq axis -> lanes (dense at real S).
    x = x_ref[...]
    # rotate_half == roll by d/2 along the channel (sublane) axis; XLU op, VALU stays free.
    rolled = pltpu.roll(x, shift=x.shape[0] // 2, axis=0)
    # Sign already folded into the sin table -> plain FMA chain, no extra temporaries.
    o_ref[...] = x * cos_ref[...] + rolled * sin_ref[...]


def rotary_positional_encoding(x, cos_t, sin_signed_t, *, seq_tile=None):
    """x: (batch, seq, d_model) f32; tables are the (d_model, max_len) constants above."""
    b, s, d = x.shape
    max_len = cos_t.shape[1]
    assert s <= max_len and d == cos_t.shape[0]
    if s != max_len:  # forward() uses the first s rows of the table (no-op at the test shape)
        cos_t = cos_t[:, :s]
        sin_signed_t = sin_signed_t[:, :s]

    # Seq tiling: production shapes should use a multiple of 128 (e.g. 512) so each block
    # is lane-dense and auto double-buffered; tiny / non-divisible S -> one full block.
    if seq_tile is None or seq_tile >= s or s % seq_tile != 0 or seq_tile % 128 != 0:
        seq_tile = s
    n_seq = s // seq_tile
    # NOTE(v7x): keep 2*(x_tile + out_tile) + cos/sin tiles well under the ~32 MiB scoped
    # VMEM (64 MiB physical); seq_tile in the 512..2048 range with d_model=8 f32 is tiny.

    # Channel-major view so seq maps to lanes. Trivial at this size; at production scale
    # keep activations in (B, D, S) end-to-end instead of transposing per call.
    x_t = jnp.transpose(x, (0, 2, 1))                                           # (b, d, s)

    out_t = pl.pallas_call(
        rope_kernel,
        out_shape=jax.ShapeDtypeStruct((b, d, s), x.dtype),
        grid_spec=pltpu.PrefetchScalarGridSpec(
            num_scalar_prefetch=0,
            grid=(b, n_seq),
            in_specs=[
                pl.BlockSpec((pl.Squeezed(), d, seq_tile), lambda bi, ti: (bi, 0, ti)),
                # Batch-invariant index_maps: the cos/sin tiles stay VMEM-resident across
                # the batch grid axis instead of being re-DMA'd every step.
                pl.BlockSpec((d, seq_tile), lambda bi, ti: (0, ti)),
                pl.BlockSpec((d, seq_tile), lambda bi, ti: (0, ti)),
            ],
            out_specs=pl.BlockSpec((pl.Squeezed(), d, seq_tile),
                                   lambda bi, ti: (bi, 0, ti)),
        ),
        compiler_params=pltpu.CompilerParams(
            # Both axes are independent elementwise work -> shard across the 2 TCs on v7x;
            # harmless on single-TC v5e/v6e.
            dimension_semantics=("parallel", "parallel"),
        ),
    )(x_t, cos_t, sin_signed_t)

    return jnp.transpose(out_t, (0, 2, 1))                                      # back to (b, s, d)


def rope_reference(x, d_model, max_len):
    """Pure-JAX mirror of the PyTorch forward (unsigned, seq-major tables)."""
    pos = jnp.arange(max_len, dtype=jnp.float32)[:, None]
    p = 10000.0 ** (-jnp.arange(0, d_model // 2, dtype=jnp.float32) / d_model)[None, :]
    ang = jnp.concatenate([pos * p, pos * p], axis=1)
    cos = jnp.cos(ang)[: x.shape[1]]
    sin = jnp.sin(ang)[: x.shape[1]]
    half = d_model // 2
    x1 = x[:, :, :half]
    x2 = -x[:, :, half:]
    new_x = jnp.concatenate([x2, x1], axis=2)
    return x * cos + new_x * sin


if __name__ == "__main__":
    key = jax.random.PRNGKey(0)
    x = jax.random.normal(key, (BATCH, MAX_LEN, D_MODEL), dtype=jnp.float32)

    cos_t, sin_signed_t = make_rope_tables(D_MODEL, MAX_LEN)

    out = rotary_positional_encoding(x, cos_t, sin_signed_t)
    out = jax.block_until_ready(out)

    ref = rope_reference(x, D_MODEL, MAX_LEN)
    assert out.shape == (BATCH, MAX_LEN, D_MODEL)
    assert jnp.allclose(out, ref, atol=1e-5, rtol=1e-5)

    print("KERNEL_OK")
</pallas_src>

<mosaic_0001>
module attributes {stable_mosaic.version = 11 : i64} {
  func.func @rope_kernel(%arg0: i32, %arg1: i32, %arg2: memref<1x8x10xf32, #tpu.memory_space<vmem>>, %arg3: memref<8x10xf32, #tpu.memory_space<vmem>>, %arg4: memref<8x10xf32, #tpu.memory_space<vmem>>, %arg5: memref<1x8x10xf32, #tpu.memory_space<vmem>>) attributes {dimension_semantics = [#tpu.dimension_semantics<parallel>, #tpu.dimension_semantics<parallel>], iteration_bounds = array<i64: 2, 1>, scalar_prefetch = 0 : i64, scratch_operands = 0 : i64, tpu.core_type = #tpu.core_type<tc>, window_params = [{transform_indices = @transform_0, window_bounds = array<i64: 1, 8, 10>}, {transform_indices = @transform_1, window_bounds = array<i64: 8, 10>}, {transform_indices = @transform_2, window_bounds = array<i64: 8, 10>}, {transform_indices = @transform_3, window_bounds = array<i64: 1, 8, 10>}]} {
    %c0 = arith.constant 0 : index
    %c0_0 = arith.constant 0 : index
    %c0_1 = arith.constant 0 : index
    %0 = vector.load %arg2[%c0, %c0_0, %c0_1] : memref<1x8x10xf32, #tpu.memory_space<vmem>>, vector<1x8x10xf32>
    %1 = vector.shape_cast %0 : vector<1x8x10xf32> to vector<8x10xf32>
    %c4_i32 = arith.constant 4 : i32
    %2 = tpu.dynamic_rotate %1 by %c4_i32 dim 0 : vector<8x10xf32>, i32 -> vector<8x10xf32>
    %c0_2 = arith.constant 0 : index
    %c0_3 = arith.constant 0 : index
    %3 = vector.load %arg3[%c0_2, %c0_3] : memref<8x10xf32, #tpu.memory_space<vmem>>, vector<8x10xf32>
    %4 = arith.mulf %1, %3 : vector<8x10xf32>
    %c0_4 = arith.constant 0 : index
    %c0_5 = arith.constant 0 : index
    %5 = vector.load %arg4[%c0_4, %c0_5] : memref<8x10xf32, #tpu.memory_space<vmem>>, vector<8x10xf32>
    %6 = arith.mulf %2, %5 : vector<8x10xf32>
    %7 = arith.addf %4, %6 : vector<8x10xf32>
    %c0_6 = arith.constant 0 : index
    %c0_7 = arith.constant 0 : index
    %c0_8 = arith.constant 0 : index
    %8 = vector.load %arg5[%c0_6, %c0_7, %c0_8] : memref<1x8x10xf32, #tpu.memory_space<vmem>>, vector<1x8x10xf32>
    %9 = vector.shape_cast %8 : vector<1x8x10xf32> to vector<8x10xf32>
    %10 = vector.shape_cast %7 : vector<8x10xf32> to vector<1x8x10xf32>
    tpu.vector_store %arg5[%c0_6, %c0_7, %c0_8], %10 {strides = array<i32>} : memref<1x8x10xf32, #tpu.memory_space<vmem>>, vector<1x8x10xf32>,
    return
  }
  func.func @transform_0(%arg0: i32, %arg1: i32) -> (i32, i32, i32) {
    %c0_i32 = arith.constant 0 : i32
    %c0_i32_0 = arith.constant 0 : i32
    return %arg0, %c0_i32, %arg1 : i32, i32, i32
  }
  func.func @transform_1(%arg0: i32, %arg1: i32) -> (i32, i32) {
    %c0_i32 = arith.constant 0 : i32
    %c0_i32_0 = arith.constant 0 : i32
    return %c0_i32, %arg1 : i32, i32
  }
  func.func @transform_2(%arg0: i32, %arg1: i32) -> (i32, i32) {
    %c0_i32 = arith.constant 0 : i32
    %c0_i32_0 = arith.constant 0 : i32
    return %c0_i32, %arg1 : i32, i32
  }
  func.func @transform_3(%arg0: i32, %arg1: i32) -> (i32, i32, i32) {
    %c0_i32 = arith.constant 0 : i32
    %c0_i32_0 = arith.constant 0 : i32
    return %arg0, %c0_i32, %arg1 : i32, i32, i32
  }
}

</mosaic_0001>

<llo_original>
// kernel: tpu_custom_call.1
$region0: #{tpu_custom_call.1}
  #allocation0 [shape = 'u32[]', space=smem, size = 0x4, offset = 0x4, fixed_abs, tag = 'smem constant byte address 0x4 - core index']
  #allocation1 [shape = 'u32[144,128]{1,0:T(1,128)}', space=vmem, size = 0x12000, scoped, tag = 'internal scratch']
  %s0 = inlined_call_operand.hbm [shape: f32[2,8,10], index: 0, kind: input, shape index: {}]
  %s1 = inlined_call_operand.hbm [shape: f32[8,10], index: 1, kind: input, shape index: {}]
  %s2 = inlined_call_operand.hbm [shape: f32[8,10], index: 2, kind: input, shape index: {}]
  %s3 = inlined_call_operand.hbm [shape: f32[2,8,10], index: 3, kind: output, shape index: {}]
  %s4 = sld [smem:[#allocation0]]
  $region57: #{tpu_custom_call.1} parent=0
    _
  %s6 = ssub.s32 1, %s4
  %s7 = scalar_select 0, %s6, %s4
  $region1: #{tpu_custom_call.1} parent=0
    #allocation2 [shape = 'u8[8192]{0}', space=vmem, size = 0x2000, scoped, tag = 'input window, operand 0']
    #allocation3 [shape = 's32[2]{0}', space=sflag, size = 0x8, scoped, tag = 'scoped memory for tpu_custom_call.1']
    #allocation4 [shape = 's32[2]{0}', space=sflag, size = 0x8, scoped, tag = 'scoped memory for tpu_custom_call.1']
    #allocation5 [shape = 'u8[4096]{0}', space=vmem, size = 0x1000, scoped, tag = 'input window, operand 1, single buffered']
    #allocation6 [shape = 's32[1]{0}', space=sflag, size = 0x4, scoped, tag = 'scoped memory for tpu_custom_call.1']
    #allocation7 [shape = 'u8[4096]{0}', space=vmem, size = 0x1000, scoped, tag = 'input window, operand 2, single buffered']
    #allocation8 [shape = 'u8[8192]{0}', space=vmem, size = 0x2000, scoped, tag = 'output window, operand 0']
    %8 = vsyncpa [#allocation3], 0
    %s9 = scalar_lea.sflag [#allocation3], 1
    %10 = vsyncpa %s9, 0
    %11 = vsyncpa [#allocation6], 0
    %12 = vsyncpa [#allocation4], 0
    %s13 = scalar_lea.sflag [#allocation4], 1
    %14 = vsyncpa %s13, 0
    loop: start=0, step=1, limit=4
    $region2: #{tpu_custom_call.1} parent=1 // loop_pre_header
      _
    $region3: #{tpu_custom_call.1} parent=1 // loop_header
      %s16 = sphi 0, %s20
      %p17 = scmp.ge.s32.totalorder %s16, 4
      %s23 = sphi 0, %s35
      %s24 = sphi 0, %s31
      %s25 = sphi 0, %s23
      %s26 = sphi 0, %s24
      %s27 = sphi 0, %s25
      %s28 = sphi 0, %s26
      %s40 = sphi 0, %s42
      %s43 = sphi 0, %s40
      %s44 = sphi 0, %s43
      %s60 = sphi 0, %s44
      %s66 = sphi 0, %s68
      %s69 = sphi 0, %s66
      %s70 = sphi 0, %s69
      %s86 = sphi 0, %s70
      %s92 = sphi 0, %s94
      %s95 = sphi 0, %s92
      %s96 = sphi 0, %s95
      %s112 = sphi 0, %s96
      %s120 = sphi 0, %s122
      %s123 = sphi 0, %s120
      %s124 = sphi 0, %s123
      %s140 = sphi 0, %s124
    $region4: #{tpu_custom_call.1} parent=1 // loop_header_branch
      %19 = sbr.rel (%p17) target = $region8
    $region5: #{tpu_custom_call.1} parent=1 // loop_body
      %s21 = ssub.s32 %s16, 1
      %s22 = ssub.s32 %s16, 2
      %s29 = sadd.s32 1, %s24
      %p30 = scmp.ge.s32.totalorder %s29, 1
      %s31 = scalar_select %p30, 0, %s29
      %s32 = sadd.s32 1, %s23
      %s33 = scalar_select %p30, %s32, %s23
      %p34 = scmp.ge.s32.totalorder %s33, 2
      %s35 = scalar_select %p34, 0, %s33
      %s36 = ssub.s32 %s23, %s35
      %s37 = ssub.s32 %s24, %s31
      %s38 = sor.u32 %s36, %s37
      %p39 = scmp.eq.s32.totalorder %s38, 0
      %s41 = sadd.s32 %s40, 1
      %s42 = scalar_select %p39, %s40, %s41
      %p45 = pneg %p39
      %p46 = scmp.eq.s32.totalorder %s16, 1
      %p47 = por %p45, %p46
      %p48 = scmp.ne.s32.totalorder %s40, %s43
      %p49 = scmp.eq.s32.totalorder %s16, 0
      %p50 = por %p48, %p49
      %p51 = scmp.ne.s32.totalorder %s40, %s43
      %p52 = scmp.eq.s32.totalorder %s21, 1
      %p53 = por %p51, %p52
      %p54 = scmp.ne.s32.totalorder %s43, %s44
      %p55 = scmp.eq.s32.totalorder %s21, 0
      %p56 = por %p54, %p55
      %p57 = scmp.ne.s32.totalorder %s43, %s44
      %p58 = scmp.eq.s32.totalorder %s22, 1
      %p59 = por %p57, %p58
      %p61 = scmp.ne.s32.totalorder %s44, %s60
      %p62 = scmp.eq.s32.totalorder %s22, 0
      %p63 = por %p61, %p62
      %s64 = ssub.s32 %s24, %s31
      %p65 = scmp.eq.s32.totalorder %s64, 0
      %s67 = sadd.s32 %s66, 1
      %s68 = scalar_select %p65, %s66, %s67
      %p71 = pneg %p65
      %p72 = scmp.eq.s32.totalorder %s16, 1
      %p73 = por %p71, %p72
      %p74 = scmp.ne.s32.totalorder %s66, %s69
      %p75 = scmp.eq.s32.totalorder %s16, 0
      %p76 = por %p74, %p75
      %p77 = scmp.ne.s32.totalorder %s66, %s69
      %p78 = scmp.eq.s32.totalorder %s21, 1
      %p79 = por %p77, %p78
      %p80 = scmp.ne.s32.totalorder %s69, %s70
      %p81 = scmp.eq.s32.totalorder %s21, 0
      %p82 = por %p80, %p81
      %p83 = scmp.ne.s32.totalorder %s69, %s70
      %p84 = scmp.eq.s32.totalorder %s22, 1
      %p85 = por %p83, %p84
      %p87 = scmp.ne.s32.totalorder %s70, %s86
      %p88 = scmp.eq.s32.totalorder %s22, 0
      %p89 = por %p87, %p88
      %s90 = ssub.s32 %s24, %s31
      %p91 = scmp.eq.s32.totalorder %s90, 0
      %s93 = sadd.s32 %s92, 1
      %s94 = scalar_select %p91, %s92, %s93
      %p97 = pneg %p91
      %p98 = scmp.eq.s32.totalorder %s16, 1
      %p99 = por %p97, %p98
      %p100 = scmp.ne.s32.totalorder %s92, %s95
      %p101 = scmp.eq.s32.totalorder %s16, 0
      %p102 = por %p100, %p101
      %p103 = scmp.ne.s32.totalorder %s92, %s95
      %p104 = scmp.eq.s32.totalorder %s21, 1
      %p105 = por %p103, %p104
      %p106 = scmp.ne.s32.totalorder %s95, %s96
      %p107 = scmp.eq.s32.totalorder %s21, 0
      %p108 = por %p106, %p107
      %p109 = scmp.ne.s32.totalorder %s95, %s96
      %p110 = scmp.eq.s32.totalorder %s22, 1
      %p111 = por %p109, %p110
      %p113 = scmp.ne.s32.totalorder %s96, %s112
      %p114 = scmp.eq.s32.totalorder %s22, 0
      %p115 = por %p113, %p114
      %s116 = ssub.s32 %s23, %s35
      %s117 = ssub.s32 %s24, %s31
      %s118 = sor.u32 %s116, %s117
      %p119 = scmp.eq.s32.totalorder %s118, 0
      %s121 = sadd.s32 %s120, 1
      %s122 = scalar_select %p119, %s120, %s121
      %p125 = pneg %p119
      %p126 = scmp.eq.s32.totalorder %s16, 1
      %p127 = por %p125, %p126
      %p128 = scmp.ne.s32.totalorder %s120, %s123
      %p129 = scmp.eq.s32.totalorder %s16, 0
      %p130 = por %p128, %p129
      %p131 = scmp.ne.s32.totalorder %s120, %s123
      %p132 = scmp.eq.s32.totalorder %s21, 1
      %p133 = por %p131, %p132
      %p134 = scmp.ne.s32.totalorder %s123, %s124
      %p135 = scmp.eq.s32.totalorder %s21, 0
      %p136 = por %p134, %p135
      %p137 = scmp.ne.s32.totalorder %s123, %s124
      %p138 = scmp.eq.s32.totalorder %s22, 1
      %p139 = por %p137, %p138
      %p141 = scmp.ne.s32.totalorder %s124, %s140
      %p142 = scmp.eq.s32.totalorder %s22, 0
      %p143 = por %p141, %p142
      %p144 = scmp.le.s32.totalorder 1, %s16
      %p145 = scmp.lt.s32.totalorder %s16, 3
      %p146 = pnand %p144, %p145
      %p147 = pneg %p146
      // Predicated region
      $region9: #{tpu_custom_call.1} parent=5 // pred_check
        _
      $region10: #{tpu_custom_call.1} parent=5 // pred_check_branch
        %149 = sbr.rel (%p146) target = $region12
      $region11: #{tpu_custom_call.1} parent=5 // pred_region
        %s150 = ssub.s32 %s16, 1
        // Predicated region
        $region13: #{tpu_custom_call.1} parent=11 // pred_check
          %p151 = pneg %p82
        $region14: #{tpu_custom_call.1} parent=11 // pred_check_branch
          %153 = sbr.rel (%p151) target = $region16
        $region15: #{tpu_custom_call.1} parent=11 // pred_region
          %s155 = ssub.s32 128, 128
          %156 = vsyncadd [#allocation6], %s155
          %s157 = smul.addr %s26, 128
          %s158 = scalar_lea.hbm %s1, %s157
          %s160 = sshll.u32 [#allocation5], 4
          %s161 = int_to_ptr.vmem [resolvable:$true] %s160
          %163 = dma.hbm_to_vmem [thread:$0]  %s158, 128, %s161, [#allocation6]
        $region16: #{tpu_custom_call.1} parent=11 // pred_fallthru
          _
        // Predicated region
        $region17: #{tpu_custom_call.1} parent=11 // pred_check
          %p164 = pneg %p108
        $region18: #{tpu_custom_call.1} parent=11 // pred_check_branch
          %166 = sbr.rel (%p164) target = $region20
        $region19: #{tpu_custom_call.1} parent=11 // pred_region
          %s168 = ssub.s32 128, 128
          %169 = vsyncadd [#allocation6], %s168
          %s170 = smul.addr %s26, 128
          %s171 = scalar_lea.hbm %s2, %s170
          %s173 = sshll.u32 [#allocation7], 4
          %s174 = int_to_ptr.vmem [resolvable:$true] %s173
          %176 = dma.hbm_to_vmem [thread:$0]  %s171, 128, %s174, [#allocation6]
        $region20: #{tpu_custom_call.1} parent=11 // pred_fallthru
          _
      $region12: #{tpu_custom_call.1} parent=5 // pred_fallthru
        _
      %p177 = scmp.lt.s32.totalorder %s16, 2
      // Predicated region
      $region21: #{tpu_custom_call.1} parent=5 // pred_check
        %p178 = pneg %p177
      $region22: #{tpu_custom_call.1} parent=5 // pred_check_branch
        %180 = sbr.rel (%p178) target = $region24
      $region23: #{tpu_custom_call.1} parent=5 // pred_region
        // Predicated region
        $region25: #{tpu_custom_call.1} parent=23 // pred_check
          %p181 = pneg %p50
        $region26: #{tpu_custom_call.1} parent=23 // pred_check_branch
          %183 = sbr.rel (%p181) target = $region28
        $region27: #{tpu_custom_call.1} parent=23 // pred_region
          %s184 = sand.u32 %s40, 1
          %s185 = scalar_lea.sflag [#allocation3], %s184
          %s186 = sand.u32 %s40, 1
          %s187 = smul.addr %s186, 8
          %s188 = scalar_lea.vmem [#allocation2], %s187
          %s190 = ssub.s32 128, 128
          %191 = vsyncadd %s185, %s190
          %s192 = sadd.s32 %s24, %s23
          %s193 = smul.addr %s192, 128
          %s194 = scalar_lea.hbm %s0, %s193
          %s196 = sshll.u32 %s188, 4
          %s197 = int_to_ptr.vmem [resolvable:$true] %s196
          %199 = dma.hbm_to_vmem [thread:$0]  %s194, 128, %s197, %s185
        $region28: #{tpu_custom_call.1} parent=23 // pred_fallthru
          _
      $region24: #{tpu_custom_call.1} parent=5 // pred_fallthru
        _
      %p200 = scmp.le.s32.totalorder 1, %s16
      %p201 = scmp.lt.s32.totalorder %s16, 3
      %p202 = pnand %p200, %p201
      %p203 = pneg %p202
      // Predicated region
      $region29: #{tpu_custom_call.1} parent=5 // pred_check
        _
      $region30: #{tpu_custom_call.1} parent=5 // pred_check_branch
        %205 = sbr.rel (%p202) target = $region32
      $region31: #{tpu_custom_call.1} parent=5 // pred_region
        %s206 = ssub.s32 %s16, 1
        %s207 = sand.u32 %s43, 1
        %s208 = scalar_lea.sflag [#allocation3], %s207
        %s209 = sand.u32 %s43, 1
        %s210 = smul.addr %s209, 8
        %s211 = scalar_lea.vmem [#allocation2], %s210
        // Predicated region
        $region33: #{tpu_custom_call.1} parent=31 // pred_check
          %p212 = pneg %p56
        $region34: #{tpu_custom_call.1} parent=31 // pred_check_branch
          %214 = sbr.rel (%p212) target = $region36
        $region35: #{tpu_custom_call.1} parent=31 // pred_region
          %215 = dma.done %s208, 128
        $region36: #{tpu_custom_call.1} parent=31 // pred_fallthru
          _
        // Predicated region
        $region37: #{tpu_custom_call.1} parent=31 // pred_check
          %p216 = pneg %p82
        $region38: #{tpu_custom_call.1} parent=31 // pred_check_branch
          %218 = sbr.rel (%p216) target = $region40
        $region39: #{tpu_custom_call.1} parent=31 // pred_region
          %219 = dma.done [#allocation6], 128
        $region40: #{tpu_custom_call.1} parent=31 // pred_fallthru
          _
        // Predicated region
        $region41: #{tpu_custom_call.1} parent=31 // pred_check
          %p220 = pneg %p108
        $region42: #{tpu_custom_call.1} parent=31 // pred_check_branch
          %222 = sbr.rel (%p220) target = $region44
        $region43: #{tpu_custom_call.1} parent=31 // pred_region
          %223 = dma.done [#allocation6], 128
        $region44: #{tpu_custom_call.1} parent=31 // pred_fallthru
          _
        %s224 = sand.u32 %s43, 1
        %s225 = scalar_lea.sflag [#allocation3], %s224
        %s226 = sand.u32 %s43, 1
        %s227 = smul.addr %s226, 8
        %s228 = scalar_lea.vmem [#allocation2], %s227
        %p229 = pneg %p56
        %p230 = pneg %p53
        %p231 = pneg %p82
        %p232 = pneg %p79
        %p233 = pneg %p108
        %p234 = pneg %p105
        %p235 = pneg %p136
        %p236 = pneg %p133
        %s237 = sand.u32 %s123, 1
        %s238 = scalar_lea.sflag [#allocation4], %s237
        %s239 = sand.u32 %s123, 1
        %s240 = smul.addr %s239, 8
        %s241 = scalar_lea.vmem [#allocation8], %s240
        %v242 = vld [vmem:[%s211] sm:$0xff]
        %v243 = vrot.slane %v242, 4
        %v244 = vld [vmem:[#allocation5] sm:$0xff]
        %v245 = vmul.f32 %v242, %v244
        %v246 = vld [vmem:[#allocation7] sm:$0xff]
        %v247 = vmul.f32 %v243, %v246
        %v248 = vadd.f32 %v245, %v247
        %vm249 = vcmask 80896
        %250 = vst.msk [vmem:[%s241] sm:$0xff] %vm249, %v248
        %s251 = sand.u32 %s123, 1
        %s252 = scalar_lea.sflag [#allocation4], %s251
        %s253 = sand.u32 %s123, 1
        %s254 = smul.addr %s253, 8
        %s255 = scalar_lea.vmem [#allocation8], %s254
        // Predicated region
        $region45: #{tpu_custom_call.1} parent=31 // pred_check
          %p256 = pneg %p133
        $region46: #{tpu_custom_call.1} parent=31 // pred_check_branch
          %258 = sbr.rel (%p256) target = $region48
        $region47: #{tpu_custom_call.1} parent=31 // pred_region
          %s260 = ssub.s32 128, 128
          %261 = vsyncadd %s252, %s260
          %s262 = sadd.s32 %s26, %s25
          %s263 = smul.addr %s262, 128
          %s264 = scalar_lea.hbm %s3, %s263
          %s266 = sshll.u32 %s255, 4
          %s267 = int_to_ptr.vmem [resolvable:$true] %s266
          %269 = dma.vmem_to_hbm [thread:$0]  %s267, 128, %s264, %s252
        $region48: #{tpu_custom_call.1} parent=31 // pred_fallthru
          _
      $region32: #{tpu_custom_call.1} parent=5 // pred_fallthru
        _
      %p270 = scmp.le.s32.totalorder 2, %s16
      // Predicated region
      $region49: #{tpu_custom_call.1} parent=5 // pred_check
        %p271 = pneg %p270
      $region50: #{tpu_custom_call.1} parent=5 // pred_check_branch
        %273 = sbr.rel (%p271) target = $region52
      $region51: #{tpu_custom_call.1} parent=5 // pred_region
        %s274 = ssub.s32 %s16, 2
        // Predicated region
        $region53: #{tpu_custom_call.1} parent=51 // pred_check
          %p275 = pneg %p139
        $region54: #{tpu_custom_call.1} parent=51 // pred_check_branch
          %277 = sbr.rel (%p275) target = $region56
        $region55: #{tpu_custom_call.1} parent=51 // pred_region
          %s278 = sand.u32 %s124, 1
          %s279 = scalar_lea.sflag [#allocation4], %s278
          %s280 = sand.u32 %s124, 1
          %s281 = smul.addr %s280, 8
          %s282 = scalar_lea.vmem [#allocation8], %s281
          %283 = dma.done %s279, 128
        $region56: #{tpu_custom_call.1} parent=51 // pred_fallthru
          _
      $region52: #{tpu_custom_call.1} parent=5 // pred_fallthru
        _
    $region6: #{tpu_custom_call.1} parent=1 // loop_footer
      %s20 = sadd.s32 1, %s16
    $region7: #{tpu_custom_call.1} parent=1 // loop_footer_branch
      %15 = sbr.rel target = $region3
    $region8: #{tpu_custom_call.1} parent=1 // loop_exit
      _
    %284 = vsyncpa [#allocation3], 1
    %s285 = scalar_lea.sflag [#allocation3], 1
    %286 = vsyncpa %s285, 1
    %287 = vsyncpa [#allocation6], 1
    %288 = vsyncpa [#allocation4], 1
    %s289 = scalar_lea.sflag [#allocation4], 1
    %290 = vsyncpa %s289, 1

</llo_original>
